<compile_context>
chip_gen: v6e
topology: v6e:2x2x1
jax: 0.10.0
libtpu: 0.0.40
codegen_flags: <defaults>
</compile_context>

<pallas_src>
import functools

import jax
import jax.numpy as jnp
import numpy as np
from jax.experimental import pallas as pl
from jax.experimental.pallas import tpu as pltpu


def _dwsep_kernel(x_ref, halo_ref, wd_ref, wp_ref, bprime_ref, o_ref,
                  *, pointwise_on_vpu: bool, mxu_bf16: bool):
    x = x_ref[...].astype(jnp.float32)        # (C, TL)
    halo = halo_ref[...].astype(jnp.float32)  # (C, 2): [:,0]=col left of tile, [:,1]=col right
    wd = wd_ref[...]                          # (C, 3)   depthwise taps (f32)
    bprime = bprime_ref[...]                  # (C, 1)   folded bias (wp @ bd + bp), f32

    left = halo[:, 0:1]                       # (C, 1)
    right = halo[:, 1:2]                      # (C, 1)

    # Shifted operands for the k=3, padding=1 depthwise conv (PyTorch
    # cross-correlation).  Halo columns are stitched in directly: no iota /
    # where edge masking.
    x_lm1 = jnp.concatenate([left, x[:, :-1]], axis=1)   # x[c, l-1]
    x_lp1 = jnp.concatenate([x[:, 1:], right], axis=1)   # x[c, l+1]

    depth = (wd[:, 0:1] * x_lm1
             + wd[:, 1:2] * x
             + wd[:, 2:3] * x_lp1)                        # (C, TL), f32

    C = x.shape[0]
    wp = wp_ref[...]                                      # (C, C) f32 or bf16
    if pointwise_on_vpu:
        # Tiny C: channel mixing as C broadcast-FMAs on the VPU; the MXU would
        # be almost entirely padding at C <= 16.
        acc = wp[:, 0:1].astype(jnp.float32) * depth[0:1, :]
        for c in range(1, C):
            acc = acc + wp[:, c:c + 1].astype(jnp.float32) * depth[c:c + 1, :]
        out = acc + bprime
    else:
        rhs = depth.astype(jnp.bfloat16) if mxu_bf16 else depth
        out = jnp.dot(wp, rhs, preferred_element_type=jnp.float32) + bprime

    o_ref[...] = out.astype(o_ref.dtype)


def _vmem_limit_bytes():
    """Generation-aware scoped-VMEM limit (3/4 of physical, capped at 100 MiB)."""
    try:
        cap = int(pltpu.get_tpu_info().vmem_capacity_bytes)
    except Exception:
        cap = 64 * 1024 * 1024  # conservative: v7x physical per-TC VMEM
    limit = min(cap * 3 // 4, 100 * 1024 * 1024)
    return max(limit, 16 * 1024 * 1024)


def _choose_tile_lanes(L, C, x_itemsize, out_itemsize, wp_itemsize, vmem_limit):
    """Largest 128-multiple length-tile whose full VMEM footprint fits."""
    # Resident weights / halo, double-buffered by the pipeline.
    fixed = 2 * (C * C * wp_itemsize   # wp
                 + C * 3 * 4           # wd
                 + C * 1 * 4           # bprime
                 + C * 2 * 4)          # halo
    budget = vmem_limit - fixed - (2 << 20)  # slack for compiler scratch
    # Per length-lane: double-buffered in + out tiles plus ~4 f32 body temps
    # (x_lm1, x_lp1, depth, out).
    per_lane = C * (2 * x_itemsize + 2 * out_itemsize + 4 * 4)
    if budget < per_lane * 128:
        max_lanes = 128
    else:
        max_lanes = (budget // per_lane) // 128 * 128
    return int(L if L <= max_lanes else max_lanes)


def deepwise_separable_conv(x, wd, bd, wp, bp, *,
                            tile_lanes=None, use_bf16_mxu=None):
    """x: (B, C, L) NCL.  wd: (C,3), bd: (C,), wp: (C,C), bp: (C,).

    Returns (B, C, L) with the same dtype as x.
    """
    B, C, L = x.shape
    out_dtype = x.dtype

    pointwise_on_vpu = C <= 16
    if use_bf16_mxu is None:
        # f32-decomposed MXU matmul becomes the binding unit around C~256 on
        # v5e/v7x; roughly neutral on v6e (HBM-bound).  Never for the VPU path.
        use_bf16_mxu = C >= 256
    mxu_bf16 = bool(use_bf16_mxu) and not pointwise_on_vpu

    # Fold depthwise bias into the pointwise bias:
    # point(depth + bd) = wp @ depth + (wp @ bd + bp).
    wp_f32 = wp.astype(jnp.float32)
    bprime = (wp_f32 @ bd.reshape(C, 1).astype(jnp.float32)
              + bp.reshape(C, 1).astype(jnp.float32))
    wd_f32 = wd.astype(jnp.float32)
    # Cast wp once in the wrapper when using the bf16 MXU path (halves its DMA
    # bytes and VMEM footprint, removes a per-step C x C VPU cast).
    wp_mxu = wp_f32.astype(jnp.bfloat16) if mxu_bf16 else wp_f32

    vmem_limit = _vmem_limit_bytes()
    if tile_lanes is None:
        tl = _choose_tile_lanes(L, C, x.dtype.itemsize,
                                jnp.dtype(out_dtype).itemsize,
                                wp_mxu.dtype.itemsize, vmem_limit)
    else:
        tl = int(tile_lanes)
    tl = min(tl, L)

    # Pad L up to a multiple of the tile (padded columns are discarded); the
    # conv's own zero padding at l = L-1 is reproduced exactly by the zero pad.
    if L <= tl:
        tl, Lp, x_work = L, L, x
    else:
        Lp = ((L + tl - 1) // tl) * tl
        x_work = jnp.pad(x, ((0, 0), (0, 0), (0, Lp - L))) if Lp != L else x
    num_tiles = Lp // tl

    # Per-tile halo columns: halo[b, t, :, 0] = x[b, :, t*tl - 1] (0 at left
    # edge), halo[b, t, :, 1] = x[b, :, (t+1)*tl] (0 at right edge).
    xp = jnp.pad(x_work, ((0, 0), (0, 0), (1, 1)))
    left = xp[:, :, 0:Lp:tl]                      # (B, C, num_tiles)
    right = xp[:, :, tl + 1::tl]                  # (B, C, num_tiles)
    halo = jnp.stack([left, right], axis=-1)      # (B, C, num_tiles, 2)
    halo = jnp.transpose(halo, (0, 2, 1, 3))      # (B, num_tiles, C, 2)

    kernel = functools.partial(_dwsep_kernel,
                               pointwise_on_vpu=pointwise_on_vpu,
                               mxu_bf16=mxu_bf16)

    out = pl.pallas_call(
        kernel,
        out_shape=jax.ShapeDtypeStruct((B, C, Lp), out_dtype),
        grid_spec=pltpu.PrefetchScalarGridSpec(
            num_scalar_prefetch=0,
            grid=(B, num_tiles),
            in_specs=[
                pl.BlockSpec((None, C, tl), lambda b, t: (b, 0, t)),
                pl.BlockSpec((None, None, C, 2), lambda b, t: (b, t, 0, 0)),
                pl.BlockSpec((C, 3), lambda b, t: (0, 0)),
                pl.BlockSpec((C, C), lambda b, t: (0, 0)),
                pl.BlockSpec((C, 1), lambda b, t: (0, 0)),
            ],
            out_specs=pl.BlockSpec((None, C, tl), lambda b, t: (b, 0, t)),
        ),
        compiler_params=pltpu.CompilerParams(
            dimension_semantics=("parallel", "parallel"),
            vmem_limit_bytes=vmem_limit,
        ),
    )(x_work, halo, wd_f32, wp_mxu, bprime)

    if Lp != L:
        out = out[:, :, :L]
    return out


def reference(x, wd, bd, wp, bp):
    """Pure-JAX reference matching PyTorch semantics."""
    B, C, L = x.shape
    xp = jnp.pad(x, ((0, 0), (0, 0), (1, 1)))
    depth = (wd[None, :, 0:1] * xp[:, :, 0:L]
             + wd[None, :, 1:2] * xp[:, :, 1:L + 1]
             + wd[None, :, 2:3] * xp[:, :, 2:L + 2]
             + bd[None, :, None])
    out = jnp.einsum('oc,bcl->bol', wp, depth) + bp[None, :, None]
    return out


def _make_params(key, C):
    k1, k2, k3, k4 = jax.random.split(key, 4)
    # depth_conv: Conv1d(C, C, k=3, groups=C) -> weight (C,1,3), bias (C,)
    bound_d = 1.0 / np.sqrt(1 * 3)
    wd = jax.random.uniform(k1, (C, 3), jnp.float32, -bound_d, bound_d)
    bd = jax.random.uniform(k2, (C,), jnp.float32, -bound_d, bound_d)
    # point_conv: Conv1d(C, C, k=1) -> weight (C,C,1), bias (C,)
    bound_p = 1.0 / np.sqrt(C * 1)
    wp = jax.random.uniform(k3, (C, C), jnp.float32, -bound_p, bound_p)
    bp = jax.random.uniform(k4, (C,), jnp.float32, -bound_p, bound_p)
    return wd, bd, wp, bp


if __name__ == "__main__":
    key = jax.random.PRNGKey(0)

    # --- Test 1: module-sized input (B=2, C=4, L=16), single tile, VPU path.
    B, C, L = 2, 4, 16
    kx, kp = jax.random.split(key)
    x = jax.random.normal(kx, (B, C, L), dtype=jnp.float32)
    wd, bd, wp, bp = _make_params(kp, C)

    out = deepwise_separable_conv(x, wd, bd, wp, bp)
    out = jax.block_until_ready(out)
    ref = reference(x, wd, bd, wp, bp)
    np.testing.assert_allclose(np.asarray(out), np.asarray(ref),
                               rtol=1e-5, atol=1e-5)

    # --- Test 2: L-tiled path with cross-tile halos AND length padding
    #             (L=500 is not a multiple of the 128-lane tile).
    B2, C2, L2, TL2 = 2, 8, 500, 128
    kx2, kp2 = jax.random.split(kp)
    x2 = jax.random.normal(kx2, (B2, C2, L2), dtype=jnp.float32)
    wd2, bd2, wp2, bp2 = _make_params(kp2, C2)

    out2 = deepwise_separable_conv(x2, wd2, bd2, wp2, bp2, tile_lanes=TL2)
    out2 = jax.block_until_ready(out2)
    ref2 = reference(x2, wd2, bd2, wp2, bp2)
    np.testing.assert_allclose(np.asarray(out2), np.asarray(ref2),
                               rtol=1e-5, atol=1e-5)

    # --- Test 3: MXU pointwise path (C=32 > VPU threshold), f32 operands.
    B3, C3, L3 = 2, 32, 256
    kx3, kp3 = jax.random.split(kp2)
    x3 = jax.random.normal(kx3, (B3, C3, L3), dtype=jnp.float32)
    wd3, bd3, wp3, bp3 = _make_params(kp3, C3)

    out3 = deepwise_separable_conv(x3, wd3, bd3, wp3, bp3)
    out3 = jax.block_until_ready(out3)
    ref3 = reference(x3, wd3, bd3, wp3, bp3)
    np.testing.assert_allclose(np.asarray(out3), np.asarray(ref3),
                               rtol=1e-5, atol=1e-5)

    print("KERNEL_OK")
</pallas_src>

<mosaic_0001>
module attributes {stable_mosaic.version = 11 : i64} {
  func.func @_dwsep_kernel(%arg0: i32, %arg1: i32, %arg2: memref<1x4x16xf32, #tpu.memory_space<vmem>>, %arg3: memref<1x1x4x2xf32, #tpu.memory_space<vmem>>, %arg4: memref<4x3xf32, #tpu.memory_space<vmem>>, %arg5: memref<4x4xf32, #tpu.memory_space<vmem>>, %arg6: memref<4x1xf32, #tpu.memory_space<vmem>>, %arg7: memref<1x4x16xf32, #tpu.memory_space<vmem>>) attributes {dimension_semantics = [#tpu.dimension_semantics<parallel>, #tpu.dimension_semantics<parallel>], iteration_bounds = array<i64: 2, 1>, scalar_prefetch = 0 : i64, scratch_operands = 0 : i64, tpu.core_type = #tpu.core_type<tc>, window_params = [{transform_indices = @transform_0, window_bounds = array<i64: 1, 4, 16>}, {transform_indices = @transform_1, window_bounds = array<i64: 1, 1, 4, 2>}, {pipeline_mode = #tpu.pipeline_mode<synchronous>, transform_indices = @transform_2, window_bounds = array<i64: 4, 3>}, {pipeline_mode = #tpu.pipeline_mode<synchronous>, transform_indices = @transform_3, window_bounds = array<i64: 4, 4>}, {pipeline_mode = #tpu.pipeline_mode<synchronous>, transform_indices = @transform_4, window_bounds = array<i64: 4, 1>}, {transform_indices = @transform_5, window_bounds = array<i64: 1, 4, 16>}]} {
    %c0 = arith.constant 0 : index
    %c0_0 = arith.constant 0 : index
    %c0_1 = arith.constant 0 : index
    %0 = vector.load %arg2[%c0, %c0_0, %c0_1] : memref<1x4x16xf32, #tpu.memory_space<vmem>>, vector<1x4x16xf32>
    %1 = vector.shape_cast %0 : vector<1x4x16xf32> to vector<4x16xf32>
    %c0_2 = arith.constant 0 : index
    %c0_3 = arith.constant 0 : index
    %c0_4 = arith.constant 0 : index
    %c0_5 = arith.constant 0 : index
    %2 = vector.load %arg3[%c0_2, %c0_3, %c0_4, %c0_5] : memref<1x1x4x2xf32, #tpu.memory_space<vmem>>, vector<1x1x4x2xf32>
    %3 = vector.shape_cast %2 : vector<1x1x4x2xf32> to vector<4x2xf32>
    %c0_6 = arith.constant 0 : index
    %c0_7 = arith.constant 0 : index
    %4 = vector.load %arg4[%c0_6, %c0_7] : memref<4x3xf32, #tpu.memory_space<vmem>>, vector<4x3xf32>
    %c0_8 = arith.constant 0 : index
    %c0_9 = arith.constant 0 : index
    %5 = vector.load %arg6[%c0_8, %c0_9] : memref<4x1xf32, #tpu.memory_space<vmem>>, vector<4x1xf32>
    %6 = vector.extract_strided_slice %3 {offsets = [0, 0], sizes = [4, 1], strides = [1, 1]} : vector<4x2xf32> to vector<4x1xf32>
    %7 = vector.extract_strided_slice %3 {offsets = [0, 1], sizes = [4, 1], strides = [1, 1]} : vector<4x2xf32> to vector<4x1xf32>
    %8 = vector.extract_strided_slice %1 {offsets = [0, 0], sizes = [4, 15], strides = [1, 1]} : vector<4x16xf32> to vector<4x15xf32>
    %9 = tpu.concatenate %6, %8 in 1 : vector<4x1xf32>, vector<4x15xf32> -> vector<4x16xf32>
    %10 = vector.extract_strided_slice %1 {offsets = [0, 1], sizes = [4, 15], strides = [1, 1]} : vector<4x16xf32> to vector<4x15xf32>
    %11 = tpu.concatenate %10, %7 in 1 : vector<4x15xf32>, vector<4x1xf32> -> vector<4x16xf32>
    %12 = vector.extract_strided_slice %4 {offsets = [0, 0], sizes = [4, 1], strides = [1, 1]} : vector<4x3xf32> to vector<4x1xf32>
    %13 = vector.broadcast %12 : vector<4x1xf32> to vector<4x16xf32>
    %14 = arith.mulf %13, %9 : vector<4x16xf32>
    %15 = vector.extract_strided_slice %4 {offsets = [0, 1], sizes = [4, 1], strides = [1, 1]} : vector<4x3xf32> to vector<4x1xf32>
    %16 = vector.broadcast %15 : vector<4x1xf32> to vector<4x16xf32>
    %17 = arith.mulf %16, %1 : vector<4x16xf32>
    %18 = arith.addf %14, %17 : vector<4x16xf32>
    %19 = vector.extract_strided_slice %4 {offsets = [0, 2], sizes = [4, 1], strides = [1, 1]} : vector<4x3xf32> to vector<4x1xf32>
    %20 = vector.broadcast %19 : vector<4x1xf32> to vector<4x16xf32>
    %21 = arith.mulf %20, %11 : vector<4x16xf32>
    %22 = arith.addf %18, %21 : vector<4x16xf32>
    %c0_10 = arith.constant 0 : index
    %c0_11 = arith.constant 0 : index
    %23 = vector.load %arg5[%c0_10, %c0_11] : memref<4x4xf32, #tpu.memory_space<vmem>>, vector<4x4xf32>
    %24 = vector.extract_strided_slice %23 {offsets = [0, 0], sizes = [4, 1], strides = [1, 1]} : vector<4x4xf32> to vector<4x1xf32>
    %25 = vector.extract_strided_slice %22 {offsets = [0, 0], sizes = [1, 16], strides = [1, 1]} : vector<4x16xf32> to vector<1x16xf32>
    %26 = vector.broadcast %24 : vector<4x1xf32> to vector<4x16xf32>
    %27 = vector.broadcast %25 : vector<1x16xf32> to vector<4x16xf32>
    %28 = arith.mulf %26, %27 : vector<4x16xf32>
    %29 = vector.extract_strided_slice %23 {offsets = [0, 1], sizes = [4, 1], strides = [1, 1]} : vector<4x4xf32> to vector<4x1xf32>
    %30 = vector.extract_strided_slice %22 {offsets = [1, 0], sizes = [1, 16], strides = [1, 1]} : vector<4x16xf32> to vector<1x16xf32>
    %31 = vector.broadcast %29 : vector<4x1xf32> to vector<4x16xf32>
    %32 = vector.broadcast %30 : vector<1x16xf32> to vector<4x16xf32>
    %33 = arith.mulf %31, %32 : vector<4x16xf32>
    %34 = arith.addf %28, %33 : vector<4x16xf32>
    %35 = vector.extract_strided_slice %23 {offsets = [0, 2], sizes = [4, 1], strides = [1, 1]} : vector<4x4xf32> to vector<4x1xf32>
    %36 = vector.extract_strided_slice %22 {offsets = [2, 0], sizes = [1, 16], strides = [1, 1]} : vector<4x16xf32> to vector<1x16xf32>
    %37 = vector.broadcast %35 : vector<4x1xf32> to vector<4x16xf32>
    %38 = vector.broadcast %36 : vector<1x16xf32> to vector<4x16xf32>
    %39 = arith.mulf %37, %38 : vector<4x16xf32>
    %40 = arith.addf %34, %39 : vector<4x16xf32>
    %41 = vector.extract_strided_slice %23 {offsets = [0, 3], sizes = [4, 1], strides = [1, 1]} : vector<4x4xf32> to vector<4x1xf32>
    %42 = vector.extract_strided_slice %22 {offsets = [3, 0], sizes = [1, 16], strides = [1, 1]} : vector<4x16xf32> to vector<1x16xf32>
    %43 = vector.broadcast %41 : vector<4x1xf32> to vector<4x16xf32>
    %44 = vector.broadcast %42 : vector<1x16xf32> to vector<4x16xf32>
    %45 = arith.mulf %43, %44 : vector<4x16xf32>
    %46 = arith.addf %40, %45 : vector<4x16xf32>
    %47 = vector.broadcast %5 : vector<4x1xf32> to vector<4x16xf32>
    %48 = arith.addf %46, %47 : vector<4x16xf32>
    %c0_12 = arith.constant 0 : index
    %c0_13 = arith.constant 0 : index
    %c0_14 = arith.constant 0 : index
    %49 = vector.load %arg7[%c0_12, %c0_13, %c0_14] : memref<1x4x16xf32, #tpu.memory_space<vmem>>, vector<1x4x16xf32>
    %50 = vector.shape_cast %49 : vector<1x4x16xf32> to vector<4x16xf32>
    %51 = vector.shape_cast %48 : vector<4x16xf32> to vector<1x4x16xf32>
    tpu.vector_store %arg7[%c0_12, %c0_13, %c0_14], %51 {strides = array<i32>} : memref<1x4x16xf32, #tpu.memory_space<vmem>>, vector<1x4x16xf32>,
    return
  }
  func.func @transform_0(%arg0: i32, %arg1: i32) -> (i32, i32, i32) {
    %c0_i32 = arith.constant 0 : i32
    %c0_i32_0 = arith.constant 0 : i32
    return %arg0, %c0_i32, %arg1 : i32, i32, i32
  }
  func.func @transform_1(%arg0: i32, %arg1: i32) -> (i32, i32, i32, i32) {
    %c0_i32 = arith.constant 0 : i32
    %c0_i32_0 = arith.constant 0 : i32
    %c0_i32_1 = arith.constant 0 : i32
    return %arg0, %arg1, %c0_i32, %c0_i32_0 : i32, i32, i32, i32
  }
  func.func @transform_2(%arg0: i32, %arg1: i32) -> (i32, i32) {
    %c0_i32 = arith.constant 0 : i32
    %c0_i32_0 = arith.constant 0 : i32
    %c0_i32_1 = arith.constant 0 : i32
    return %c0_i32, %c0_i32_0 : i32, i32
  }
  func.func @transform_3(%arg0: i32, %arg1: i32) -> (i32, i32) {
    %c0_i32 = arith.constant 0 : i32
    %c0_i32_0 = arith.constant 0 : i32
    %c0_i32_1 = arith.constant 0 : i32
    return %c0_i32, %c0_i32_0 : i32, i32
  }
  func.func @transform_4(%arg0: i32, %arg1: i32) -> (i32, i32) {
    %c0_i32 = arith.constant 0 : i32
    %c0_i32_0 = arith.constant 0 : i32
    %c0_i32_1 = arith.constant 0 : i32
    return %c0_i32, %c0_i32_0 : i32, i32
  }
  func.func @transform_5(%arg0: i32, %arg1: i32) -> (i32, i32, i32) {
    %c0_i32 = arith.constant 0 : i32
    %c0_i32_0 = arith.constant 0 : i32
    return %arg0, %c0_i32, %arg1 : i32, i32, i32
  }
}

</mosaic_0001>

<llo_original>
// kernel: tpu_custom_call.1
$region0: #{tpu_custom_call.1}
  #allocation0 [shape = 'u32[]', space=smem, size = 0x4, offset = 0x4, fixed_abs, tag = 'smem constant byte address 0x4 - core index']
  #allocation1 [shape = 'u32[144,128]{1,0:T(1,128)}', space=vmem, size = 0x12000, scoped, tag = 'internal scratch']
  %s0 = inlined_call_operand.vmem [shape: f32[2,4,16], index: 0, kind: input, shape index: {}]
  %s1 = inlined_call_operand.vmem [shape: f32[2,1,4,2], index: 1, kind: input, shape index: {}]
  %s2 = inlined_call_operand.vmem [shape: f32[4,3], index: 2, kind: input, shape index: {}]
  %s3 = inlined_call_operand.vmem [shape: f32[4,4], index: 3, kind: input, shape index: {}]
  %s4 = inlined_call_operand.vmem [shape: f32[4,1], index: 4, kind: input, shape index: {}]
  %s5 = inlined_call_operand.hbm [shape: f32[2,4,16], index: 5, kind: output, shape index: {}]
  %s6 = sld [smem:[#allocation0]]
  $region53: #{tpu_custom_call.1} parent=0
    _
  %s8 = ssub.s32 1, %s6
  %s9 = scalar_select 0, %s8, %s6
  $region1: #{tpu_custom_call.1} parent=0
    #allocation2 [shape = 'u8[4096]{0}', space=vmem, size = 0x1000, scoped, tag = 'output window, operand 0']
    #allocation3 [shape = 's32[2]{0}', space=sflag, size = 0x8, scoped, tag = 'scoped memory for tpu_custom_call.1']
    %10 = vsyncpa [#allocation3], 0
    %s11 = scalar_lea.sflag [#allocation3], 1
    %12 = vsyncpa %s11, 0
    loop: start=0, step=1, limit=4
    $region2: #{tpu_custom_call.1} parent=1 // loop_pre_header
      _
    $region3: #{tpu_custom_call.1} parent=1 // loop_header
      %s14 = sphi 0, %s18
      %p15 = scmp.ge.s32.totalorder %s14, 4
      %s21 = sphi 0, %s33
      %s22 = sphi 0, %s29
      %s23 = sphi 0, %s21
      %s24 = sphi 0, %s22
      %s25 = sphi 0, %s23
      %s26 = sphi 0, %s24
      %s38 = sphi 0, %s40
      %s41 = sphi 0, %s38
      %s42 = sphi 0, %s41
      %s58 = sphi 0, %s42
      %s66 = sphi 0, %s68
      %s69 = sphi 0, %s66
      %s70 = sphi 0, %s69
      %s86 = sphi 0, %s70
      %s90 = sphi 0, %s90
      %s92 = sphi 0, %s90
      %s93 = sphi 0, %s92
      %s107 = sphi 0, %s93
      %s111 = sphi 0, %s111
      %s113 = sphi 0, %s111
      %s114 = sphi 0, %s113
      %s128 = sphi 0, %s114
      %s132 = sphi 0, %s132
      %s134 = sphi 0, %s132
      %s135 = sphi 0, %s134
      %s149 = sphi 0, %s135
      %s157 = sphi 0, %s159
      %s160 = sphi 0, %s157
      %s161 = sphi 0, %s160
      %s177 = sphi 0, %s161
    $region4: #{tpu_custom_call.1} parent=1 // loop_header_branch
      %17 = sbr.rel (%p15) target = $region8
    $region5: #{tpu_custom_call.1} parent=1 // loop_body
      %s19 = ssub.s32 %s14, 1
      %s20 = ssub.s32 %s14, 2
      %s27 = sadd.s32 1, %s22
      %p28 = scmp.ge.s32.totalorder %s27, 1
      %s29 = scalar_select %p28, 0, %s27
      %s30 = sadd.s32 1, %s21
      %s31 = scalar_select %p28, %s30, %s21
      %p32 = scmp.ge.s32.totalorder %s31, 2
      %s33 = scalar_select %p32, 0, %s31
      %s34 = ssub.s32 %s21, %s33
      %s35 = ssub.s32 %s22, %s29
      %s36 = sor.u32 %s34, %s35
      %p37 = scmp.eq.s32.totalorder %s36, 0
      %s39 = sadd.s32 %s38, 1
      %s40 = scalar_select %p37, %s38, %s39
      %p43 = pneg %p37
      %p44 = scmp.eq.s32.totalorder %s14, 1
      %p45 = por %p43, %p44
      %p46 = scmp.ne.s32.totalorder %s38, %s41
      %p47 = scmp.eq.s32.totalorder %s14, 0
      %p48 = por %p46, %p47
      %p49 = scmp.ne.s32.totalorder %s38, %s41
      %p50 = scmp.eq.s32.totalorder %s19, 1
      %p51 = por %p49, %p50
      %p52 = scmp.ne.s32.totalorder %s41, %s42
      %p53 = scmp.eq.s32.totalorder %s19, 0
      %p54 = por %p52, %p53
      %p55 = scmp.ne.s32.totalorder %s41, %s42
      %p56 = scmp.eq.s32.totalorder %s20, 1
      %p57 = por %p55, %p56
      %p59 = scmp.ne.s32.totalorder %s42, %s58
      %p60 = scmp.eq.s32.totalorder %s20, 0
      %p61 = por %p59, %p60
      %s62 = ssub.s32 %s21, %s33
      %s63 = ssub.s32 %s22, %s29
      %s64 = sor.u32 %s62, %s63
      %p65 = scmp.eq.s32.totalorder %s64, 0
      %s67 = sadd.s32 %s66, 1
      %s68 = scalar_select %p65, %s66, %s67
      %p71 = pneg %p65
      %p72 = scmp.eq.s32.totalorder %s14, 1
      %p73 = por %p71, %p72
      %p74 = scmp.ne.s32.totalorder %s66, %s69
      %p75 = scmp.eq.s32.totalorder %s14, 0
      %p76 = por %p74, %p75
      %p77 = scmp.ne.s32.totalorder %s66, %s69
      %p78 = scmp.eq.s32.totalorder %s19, 1
      %p79 = por %p77, %p78
      %p80 = scmp.ne.s32.totalorder %s69, %s70
      %p81 = scmp.eq.s32.totalorder %s19, 0
      %p82 = por %p80, %p81
      %p83 = scmp.ne.s32.totalorder %s69, %s70
      %p84 = scmp.eq.s32.totalorder %s20, 1
      %p85 = por %p83, %p84
      %p87 = scmp.ne.s32.totalorder %s70, %s86
      %p88 = scmp.eq.s32.totalorder %s20, 0
      %p89 = por %p87, %p88
      %s91 = sadd.s32 %s90, 1
      %p94 = scmp.eq.s32.totalorder %s14, 1
      %p95 = scmp.ne.s32.totalorder %s90, %s92
      %p96 = scmp.eq.s32.totalorder %s14, 0
      %p97 = por %p95, %p96
      %p98 = scmp.ne.s32.totalorder %s90, %s92
      %p99 = scmp.eq.s32.totalorder %s19, 1
      %p100 = por %p98, %p99
      %p101 = scmp.ne.s32.totalorder %s92, %s93
      %p102 = scmp.eq.s32.totalorder %s19, 0
      %p103 = por %p101, %p102
      %p104 = scmp.ne.s32.totalorder %s92, %s93
      %p105 = scmp.eq.s32.totalorder %s20, 1
      %p106 = por %p104, %p105
      %p108 = scmp.ne.s32.totalorder %s93, %s107
      %p109 = scmp.eq.s32.totalorder %s20, 0
      %p110 = por %p108, %p109
      %s112 = sadd.s32 %s111, 1
      %p115 = scmp.eq.s32.totalorder %s14, 1
      %p116 = scmp.ne.s32.totalorder %s111, %s113
      %p117 = scmp.eq.s32.totalorder %s14, 0
      %p118 = por %p116, %p117
      %p119 = scmp.ne.s32.totalorder %s111, %s113
      %p120 = scmp.eq.s32.totalorder %s19, 1
      %p121 = por %p119, %p120
      %p122 = scmp.ne.s32.totalorder %s113, %s114
      %p123 = scmp.eq.s32.totalorder %s19, 0
      %p124 = por %p122, %p123
      %p125 = scmp.ne.s32.totalorder %s113, %s114
      %p126 = scmp.eq.s32.totalorder %s20, 1
      %p127 = por %p125, %p126
      %p129 = scmp.ne.s32.totalorder %s114, %s128
      %p130 = scmp.eq.s32.totalorder %s20, 0
      %p131 = por %p129, %p130
      %s133 = sadd.s32 %s132, 1
      %p136 = scmp.eq.s32.totalorder %s14, 1
      %p137 = scmp.ne.s32.totalorder %s132, %s134
      %p138 = scmp.eq.s32.totalorder %s14, 0
      %p139 = por %p137, %p138
      %p140 = scmp.ne.s32.totalorder %s132, %s134
      %p141 = scmp.eq.s32.totalorder %s19, 1
      %p142 = por %p140, %p141
      %p143 = scmp.ne.s32.totalorder %s134, %s135
      %p144 = scmp.eq.s32.totalorder %s19, 0
      %p145 = por %p143, %p144
      %p146 = scmp.ne.s32.totalorder %s134, %s135
      %p147 = scmp.eq.s32.totalorder %s20, 1
      %p148 = por %p146, %p147
      %p150 = scmp.ne.s32.totalorder %s135, %s149
      %p151 = scmp.eq.s32.totalorder %s20, 0
      %p152 = por %p150, %p151
      %s153 = ssub.s32 %s21, %s33
      %s154 = ssub.s32 %s22, %s29
      %s155 = sor.u32 %s153, %s154
      %p156 = scmp.eq.s32.totalorder %s155, 0
      %s158 = sadd.s32 %s157, 1
      %s159 = scalar_select %p156, %s157, %s158
      %p162 = pneg %p156
      %p163 = scmp.eq.s32.totalorder %s14, 1
      %p164 = por %p162, %p163
      %p165 = scmp.ne.s32.totalorder %s157, %s160
      %p166 = scmp.eq.s32.totalorder %s14, 0
      %p167 = por %p165, %p166
      %p168 = scmp.ne.s32.totalorder %s157, %s160
      %p169 = scmp.eq.s32.totalorder %s19, 1
      %p170 = por %p168, %p169
      %p171 = scmp.ne.s32.totalorder %s160, %s161
      %p172 = scmp.eq.s32.totalorder %s19, 0
      %p173 = por %p171, %p172
      %p174 = scmp.ne.s32.totalorder %s160, %s161
      %p175 = scmp.eq.s32.totalorder %s20, 1
      %p176 = por %p174, %p175
      %p178 = scmp.ne.s32.totalorder %s161, %s177
      %p179 = scmp.eq.s32.totalorder %s20, 0
      %p180 = por %p178, %p179
      %p181 = scmp.le.s32.totalorder 1, %s14
      %p182 = scmp.lt.s32.totalorder %s14, 3
      %p183 = pnand %p181, %p182
      %p184 = pneg %p183
      // Predicated region
      $region9: #{tpu_custom_call.1} parent=5 // pred_check
        _
      $region10: #{tpu_custom_call.1} parent=5 // pred_check_branch
        %186 = sbr.rel (%p183) target = $region12
      $region11: #{tpu_custom_call.1} parent=5 // pred_region
        %s187 = ssub.s32 %s14, 1
        // Predicated region
        $region13: #{tpu_custom_call.1} parent=11 // pred_check
          %p188 = pneg %p103
        $region14: #{tpu_custom_call.1} parent=11 // pred_check_branch
          %190 = sbr.rel (%p188) target = $region16
        $region15: #{tpu_custom_call.1} parent=11 // pred_region
          _
        $region16: #{tpu_custom_call.1} parent=11 // pred_fallthru
          _
        // Predicated region
        $region17: #{tpu_custom_call.1} parent=11 // pred_check
          %p191 = pneg %p124
        $region18: #{tpu_custom_call.1} parent=11 // pred_check_branch
          %193 = sbr.rel (%p191) target = $region20
        $region19: #{tpu_custom_call.1} parent=11 // pred_region
          _
        $region20: #{tpu_custom_call.1} parent=11 // pred_fallthru
          _
        // Predicated region
        $region21: #{tpu_custom_call.1} parent=11 // pred_check
          %p194 = pneg %p145
        $region22: #{tpu_custom_call.1} parent=11 // pred_check_branch
          %196 = sbr.rel (%p194) target = $region24
        $region23: #{tpu_custom_call.1} parent=11 // pred_region
          _
        $region24: #{tpu_custom_call.1} parent=11 // pred_fallthru
          _
      $region12: #{tpu_custom_call.1} parent=5 // pred_fallthru
        _
      %p197 = scmp.lt.s32.totalorder %s14, 2
      // Predicated region
      $region25: #{tpu_custom_call.1} parent=5 // pred_check
        %p198 = pneg %p197
      $region26: #{tpu_custom_call.1} parent=5 // pred_check_branch
        %200 = sbr.rel (%p198) target = $region28
      $region27: #{tpu_custom_call.1} parent=5 // pred_region
        // Predicated region
        $region29: #{tpu_custom_call.1} parent=27 // pred_check
          %p201 = pneg %p48
        $region30: #{tpu_custom_call.1} parent=27 // pred_check_branch
          %203 = sbr.rel (%p201) target = $region32
        $region31: #{tpu_custom_call.1} parent=27 // pred_region
          %p204 = scmp.lt.s32.totalorder %s21, 1
          %s205 = scalar_select %p204, %s21, 1
          %p206 = scmp.lt.s32.totalorder %s22, 0
          %s207 = scalar_select %p206, %s22, 0
          %s208 = sadd.s32 %s207, %s205
          %s209 = smul.addr %s208, 4
          %s210 = scalar_lea.vmem %s0, %s209
        $region32: #{tpu_custom_call.1} parent=27 // pred_fallthru
          _
        // Predicated region
        $region33: #{tpu_custom_call.1} parent=27 // pred_check
          %p211 = pneg %p76
        $region34: #{tpu_custom_call.1} parent=27 // pred_check_branch
          %213 = sbr.rel (%p211) target = $region36
        $region35: #{tpu_custom_call.1} parent=27 // pred_region
          %p214 = scmp.lt.s32.totalorder %s21, 1
          %s215 = scalar_select %p214, %s21, 1
          %p216 = scmp.lt.s32.totalorder %s22, 0
          %s217 = scalar_select %p216, %s22, 0
          %s218 = sadd.s32 %s217, %s215
          %s219 = smul.addr %s218, 4
          %s220 = scalar_lea.vmem %s1, %s219
        $region36: #{tpu_custom_call.1} parent=27 // pred_fallthru
          _
      $region28: #{tpu_custom_call.1} parent=5 // pred_fallthru
        _
      %p221 = scmp.le.s32.totalorder 1, %s14
      %p222 = scmp.lt.s32.totalorder %s14, 3
      %p223 = pnand %p221, %p222
      %p224 = pneg %p223
      // Predicated region
      $region37: #{tpu_custom_call.1} parent=5 // pred_check
        _
      $region38: #{tpu_custom_call.1} parent=5 // pred_check_branch
        %226 = sbr.rel (%p223) target = $region40
      $region39: #{tpu_custom_call.1} parent=5 // pred_region
        %s227 = ssub.s32 %s14, 1
        %p228 = scmp.lt.s32.totalorder %s23, 1
        %s229 = scalar_select %p228, %s23, 1
        %p230 = scmp.lt.s32.totalorder %s24, 0
        %s231 = scalar_select %p230, %s24, 0
        %s232 = sadd.s32 %s231, %s229
        %s233 = smul.addr %s232, 4
        %s234 = scalar_lea.vmem %s0, %s233
        %p235 = pneg %p54
        %p236 = pneg %p51
        %p237 = scmp.lt.s32.totalorder %s23, 1
        %s238 = scalar_select %p237, %s23, 1
        %p239 = scmp.lt.s32.totalorder %s24, 0
        %s240 = scalar_select %p239, %s24, 0
        %s241 = sadd.s32 %s240, %s238
        %s242 = smul.addr %s241, 4
        %s243 = scalar_lea.vmem %s1, %s242
        %p244 = pneg %p82
        %p245 = pneg %p79
        %p246 = pneg %p103
        %p247 = pneg %p100
        %p248 = pneg %p124
        %p249 = pneg %p121
        %p250 = pneg %p145
        %p251 = pneg %p142
        %p252 = pneg %p173
        %p253 = pneg %p170
        %s254 = sand.u32 %s160, 1
        %s255 = scalar_lea.sflag [#allocation3], %s254
        %s256 = sand.u32 %s160, 1
        %s257 = smul.addr %s256, 4
        %s258 = scalar_lea.vmem [#allocation2], %s257
        %p259 = scmp.lt.s32.totalorder %s23, 1
        %s260 = scalar_select %p259, %s23, 1
        %p261 = scmp.lt.s32.totalorder %s24, 0
        %s262 = scalar_select %p261, %s24, 0
        %s263 = sadd.s32 %s262, %s260
        %s264 = smul.addr %s263, 4
        %s265 = scalar_lea.vmem %s0, %s264
        %p266 = scmp.lt.s32.totalorder %s23, 1
        %s267 = scalar_select %p266, %s23, 1
        %p268 = scmp.lt.s32.totalorder %s24, 0
        %s269 = scalar_select %p268, %s24, 0
        %s270 = sadd.s32 %s269, %s267
        %s271 = smul.addr %s270, 4
        %s272 = scalar_lea.vmem %s1, %s271
        %v273 = vld [vmem:[%s265] sm:$0xf]
        %v274 = vld [vmem:[%s272] sm:$0xf]
        %v275 = vld [vmem:[%s2] sm:$0xf]
        %v276 = vld [vmem:[%s4] sm:$0xf]
        %278 = vrot.lane.b32.xlu0 %v273, 1
        %v279 = vpop.permute.xlu0 %278
        %vm281 = vcmask 7168
        %v282 = vsel %vm281, %v274, %v279
        %283 = vrot.lane.b32.xlu0 %v273, 127
        %v284 = vpop.permute.xlu0 %283
        %287 = vrot.lane.b32.xlu0 %v274, 14
        %v288 = vpop.permute.xlu0 %287
        %vm290 = vcmask 121856
        %v291 = vsel %vm290, %v284, %v288
        %293 = vset.pattern.permute.xlu0 0
        %294 = vperm.xlu0 %293, %v275
        %v295 = vpop.permute.xlu0 %294
        %v297 = vmul.f32 %v295, %v282
        %298 = vset.pattern.permute.xlu0 1
        %299 = vperm.xlu0 %298, %v275
        %v300 = vpop.permute.xlu0 %299
        %v302 = vmul.f32 %v300, %v273
        %v303 = vadd.f32 %v297, %v302
        %304 = vset.pattern.permute.xlu0 2
        %305 = vperm.xlu0 %304, %v275
        %v306 = vpop.permute.xlu0 %305
        %v308 = vmul.f32 %v306, %v291
        %v309 = vadd.f32 %v303, %v308
        %v310 = vld [vmem:[%s3] sm:$0xf]
        %312 = vset.pattern.permute.xlu0 0
        %313 = vperm.xlu0 %312, %v310
        %v314 = vpop.permute.xlu0 %313
        %v316 = vlaneseq
        %v317 = vshrl.u32 %v316, 7
        %v318 = vsub.s32 0, %v317
        %v319 = vrot.slane %v309, %v318
        %v320 = vmul.f32 %v314, %v319
        %321 = vset.pattern.permute.xlu0 1
        %322 = vperm.xlu0 %321, %v310
        %v323 = vpop.permute.xlu0 %322
        %v325 = vlaneseq
        %v326 = vshrl.u32 %v325, 7
        %v327 = vsub.s32 1, %v326
        %v328 = vrot.slane %v309, %v327
        %v329 = vmul.f32 %v323, %v328
        %v330 = vadd.f32 %v320, %v329
        %331 = vset.pattern.permute.xlu0 2
        %332 = vperm.xlu0 %331, %v310
        %v333 = vpop.permute.xlu0 %332
        %v335 = vlaneseq
        %v336 = vshrl.u32 %v335, 7
        %v337 = vsub.s32 2, %v336
        %v338 = vrot.slane %v309, %v337
        %v339 = vmul.f32 %v333, %v338
        %v340 = vadd.f32 %v330, %v339
        %341 = vset.pattern.permute.xlu0 3
        %342 = vperm.xlu0 %341, %v310
        %v343 = vpop.permute.xlu0 %342
        %v345 = vlaneseq
        %v346 = vshrl.u32 %v345, 7
        %v347 = vsub.s32 3, %v346
        %v348 = vrot.slane %v309, %v347
        %v349 = vmul.f32 %v343, %v348
        %v350 = vadd.f32 %v340, %v349
        %352 = vset.pattern.permute.xlu0 0
        %353 = vperm.xlu0 %352, %v276
        %v354 = vpop.permute.xlu0 %353
        %v356 = vadd.f32 %v350, %v354
        %vm357 = vcmask 125952
        %358 = vst.msk [vmem:[%s258] sm:$0xf] %vm357, %v356
        %s359 = sand.u32 %s160, 1
        %s360 = scalar_lea.sflag [#allocation3], %s359
        %s361 = sand.u32 %s160, 1
        %s362 = smul.addr %s361, 4
        %s363 = scalar_lea.vmem [#allocation2], %s362
        // Predicated region
        $region41: #{tpu_custom_call.1} parent=39 // pred_check
          %p364 = pneg %p170
        $region42: #{tpu_custom_call.1} parent=39 // pred_check_branch
          %366 = sbr.rel (%p364) target = $region44
        $region43: #{tpu_custom_call.1} parent=39 // pred_region
          %s368 = ssub.s32 64, 64
          %369 = vsyncadd %s360, %s368
          %s370 = sadd.s32 %s24, %s23
          %s371 = smul.addr %s370, 64
          %s372 = scalar_lea.hbm %s5, %s371
          %s374 = sshll.u32 %s363, 4
          %s375 = int_to_ptr.vmem [resolvable:$true] %s374
          %377 = dma.vmem_to_hbm [thread:$0]  %s375, 64, %s372, %s360
        $region44: #{tpu_custom_call.1} parent=39 // pred_fallthru
          _
      $region40: #{tpu_custom_call.1} parent=5 // pred_fallthru
        _
      %p378 = scmp.le.s32.totalorder 2, %s14
      // Predicated region
      $region45: #{tpu_custom_call.1} parent=5 // pred_check
        %p379 = pneg %p378
      $region46: #{tpu_custom_call.1} parent=5 // pred_check_branch
        %381 = sbr.rel (%p379) target = $region48
      $region47: #{tpu_custom_call.1} parent=5 // pred_region
        %s382 = ssub.s32 %s14, 2
        // Predicated region
        $region49: #{tpu_custom_call.1} parent=47 // pred_check
          %p383 = pneg %p176
        $region50: #{tpu_custom_call.1} parent=47 // pred_check_branch
          %385 = sbr.rel (%p383) target = $region52
        $region51: #{tpu_custom_call.1} parent=47 // pred_region
          %s386 = sand.u32 %s161, 1
          %s387 = scalar_lea.sflag [#allocation3], %s386
          %s388 = sand.u32 %s161, 1
          %s389 = smul.addr %s388, 4
          %s390 = scalar_lea.vmem [#allocation2], %s389
          %391 = dma.done %s387, 64
        $region52: #{tpu_custom_call.1} parent=47 // pred_fallthru
          _
      $region48: #{tpu_custom_call.1} parent=5 // pred_fallthru
        _
    $region6: #{tpu_custom_call.1} parent=1 // loop_footer
      %s18 = sadd.s32 1, %s14
    $region7: #{tpu_custom_call.1} parent=1 // loop_footer_branch
      %13 = sbr.rel target = $region3
    $region8: #{tpu_custom_call.1} parent=1 // loop_exit
      _
    %392 = vsyncpa [#allocation3], 1
    %s393 = scalar_lea.sflag [#allocation3], 1
    %394 = vsyncpa %s393, 1

</llo_original>
